<compile_context>
chip_gen: v7x
topology: tpu7x:2x2x1
jax: 0.10.0
libtpu: 0.0.40
codegen_flags: <defaults>
</compile_context>

<pallas_src>
import functools

import jax
import jax.numpy as jnp
from jax.experimental import pallas as pl
from jax.experimental.pallas import tpu as pltpu

_MIB = 1 << 20


# ---------------------------------------------------------------------------
# Helpers
# ---------------------------------------------------------------------------

def _round_up(x, m):
    return ((x + m - 1) // m) * m


def _cdiv(a, b):
    return (a + b - 1) // b


def _tpu_info():
    """Returns (vmem_capacity_bytes, multi_tensorcore) with safe fallbacks."""
    cap = 64 << 20            # v7x per-TensorCore figure: safe everywhere.
    multi_tc = False
    try:
        info = pltpu.get_tpu_info()
        cap = int(getattr(info, "vmem_capacity_bytes", cap) or cap)
    except Exception:
        pass
    try:
        kind = jax.devices()[0].device_kind.lower()
        # v4 / v5p (megacore) and v7x expose 2 TensorCores worth of work.
        if "v4" in kind:
            multi_tc = True
        elif ("v5" in kind) and ("lite" not in kind) and ("5e" not in kind):
            multi_tc = True
        elif ("v7" in kind) or ("7x" in kind):
            multi_tc = True
    except Exception:
        pass
    return cap, multi_tc


def _candidate_tile_ms(t8, multi_tc):
    """Token-tile candidates, largest (preferred) first."""
    cands = [m for m in (1024, 768, 512, 256, 128) if m < t8]
    if t8 <= 1024:
        cands = [t8] + cands            # whole token range as a single tile
    if multi_tc and t8 >= 512:
        # Split the token range roughly evenly across the 2 TensorCores first.
        half = min(_round_up(_cdiv(t8, 2), 8), 1024)
        cands = [half] + [m for m in cands if m != half]
    return cands or [t8]


def _candidate_tile_ffs(dffp0):
    """d_ff chunk candidates, largest first, rejecting >12.5% padding waste."""
    cands = [f for f in (4096, 2048, 1024, 512, 256)
             if f <= dffp0 and _round_up(dffp0, f) <= dffp0 + dffp0 // 8]
    cands.append(min(128, dffp0))
    return cands


def _resident_bytes(tm, dmp, dffp, c_item, o_item, buf_w):
    """VMEM footprint of the resident-weight plan."""
    return (2 * tm * dmp * c_item            # x tile (double-buffered)
            + 2 * tm * dmp * o_item          # out tile (double-buffered)
            + buf_w * dmp * dffp * c_item    # W_up (resident)
            + buf_w * dffp * dmp * c_item    # W_down (resident)
            + buf_w * (dffp + dmp) * 4       # biases (f32)
            + tm * dffp * (4 + c_item)       # f32 h + compute-dtype copy
            + tm * dmp * 4                   # f32 pre-store output temp
            + 2 * _MIB)                      # headroom (internal scratch)


def _streamed_bytes(tm, tf, dmp, c_item, o_item, buf_io):
    """VMEM footprint of the streamed (d_ff-chunked) plan."""
    return (buf_io * tm * dmp * c_item       # x tile
            + buf_io * tm * dmp * o_item     # out tile
            + 2 * dmp * tf * c_item          # W_up chunk (double-buffered)
            + 2 * tf * dmp * c_item          # W_down chunk (double-buffered)
            + 2 * tf * 4                     # b_up chunk
            + buf_io * dmp * 4               # b_down
            + tm * dmp * 4                   # f32 accumulator scratch
            + tm * tf * (4 + c_item)         # f32 h chunk + compute copy
            + 2 * _MIB)


def _plan(T, dmp, dffp0, c_item, o_item, budget, multi_tc, tile_m, tile_ff):
    """Pick an execution plan (mode, tiles, buffering) under the VMEM budget."""
    t8 = _round_up(max(T, 1), 8)

    # --- Resident-weight plan: weights DMA'd once, 1-D grid over tokens. ---
    if tile_ff is None:
        tm_cands = ([tile_m] if tile_m is not None
                    else _candidate_tile_ms(t8, multi_tc))
        for tm in tm_cands:
            for buf_w in (2, 1):
                if _resident_bytes(tm, dmp, dffp0, c_item, o_item,
                                   buf_w) <= budget:
                    return dict(mode="resident", tile_m=tm, tile_ff=dffp0,
                                dffp=dffp0,
                                weight_single_buffer=(buf_w == 1),
                                io_single_buffer=False)

    # --- Streamed plan: 2-D grid (tokens x d_ff chunks) + f32 accumulator. ---
    # Prefer the largest token tile (fewest weight re-streams), then the
    # largest d_ff chunk (fewest accumulator RMW passes), then double-buffered
    # x/out if they still fit.
    tm_cands = ([tile_m] if tile_m is not None
                else _candidate_tile_ms(t8, False))
    tf_cands = [tile_ff] if tile_ff is not None else _candidate_tile_ffs(dffp0)
    for tm in tm_cands:
        for tf in tf_cands:
            for buf_io in (2, 1):
                if _streamed_bytes(tm, tf, dmp, c_item, o_item,
                                   buf_io) <= budget:
                    return dict(mode="streamed", tile_m=tm, tile_ff=tf,
                                dffp=_round_up(dffp0, tf),
                                weight_single_buffer=False,
                                io_single_buffer=(buf_io == 1))

    # Nothing fits comfortably: smallest tiles, single-buffered I/O.
    tm, tf = tm_cands[-1], tf_cands[-1]
    return dict(mode="streamed", tile_m=tm, tile_ff=tf,
                dffp=_round_up(dffp0, tf),
                weight_single_buffer=False, io_single_buffer=True)


def _spec(block_shape, index_map, single_buffer=False):
    if single_buffer:
        return pl.BlockSpec(block_shape, index_map,
                            pipeline_mode=pl.Buffered(1))
    return pl.BlockSpec(block_shape, index_map)


def _apply_activation(h, activation):
    """Activation on the f32 up-projection (bias already added)."""
    if activation == "silu":
        # silu(x) = x*sigmoid(x) = 0.5*x*(1 + tanh(x/2)) -> single EUP op.
        return 0.5 * h * (1.0 + jnp.tanh(0.5 * h))
    elif activation == "gelu":
        # tanh-approx gelu (PyTorch default is exact erf; diff ~1e-3).
        return jax.nn.gelu(h, approximate=True)
    return jnp.maximum(h, 0.0)


# ---------------------------------------------------------------------------
# Kernels
# ---------------------------------------------------------------------------

def expert_ffn_resident_kernel(x_ref, wup_ref, bup_ref, wdown_ref, bdown_ref,
                               o_ref, *, activation):
    # x_ref: (tm, dmp)  wup_ref: (dmp, dffp)  bup_ref: (1, dffp) f32
    # wdown_ref: (dffp, dmp)  bdown_ref: (1, dmp) f32  o_ref: (tm, dmp)
    h = jnp.dot(x_ref[...], wup_ref[...], preferred_element_type=jnp.float32)
    h = _apply_activation(h + bup_ref[...], activation)
    out = jnp.dot(h.astype(wdown_ref.dtype), wdown_ref[...],
                  preferred_element_type=jnp.float32)
    o_ref[...] = (out + bdown_ref[...]).astype(o_ref.dtype)


def expert_ffn_streamed_kernel(x_ref, wup_ref, bup_ref, wdown_ref, bdown_ref,
                               o_ref, acc_ref, *, activation):
    # x_ref: (tm, dmp)  wup_ref: (dmp, tf)  bup_ref: (1, tf) f32
    # wdown_ref: (tf, dmp)  bdown_ref: (1, dmp) f32  o_ref: (tm, dmp)
    # acc_ref: (tm, dmp) f32 scratch, resident across the d_ff grid axis.
    ff = pl.program_id(1)

    @pl.when(ff == 0)
    def _init():
        # Fold the down-projection bias into the accumulator init.
        acc_ref[...] = jnp.broadcast_to(bdown_ref[...], acc_ref.shape)

    h = jnp.dot(x_ref[...], wup_ref[...], preferred_element_type=jnp.float32)
    h = _apply_activation(h + bup_ref[...], activation)
    acc_ref[...] += jnp.dot(h.astype(wdown_ref.dtype), wdown_ref[...],
                            preferred_element_type=jnp.float32)

    @pl.when(ff == pl.num_programs(1) - 1)
    def _finalize():
        o_ref[...] = acc_ref[...].astype(o_ref.dtype)


# ---------------------------------------------------------------------------
# Wrapper
# ---------------------------------------------------------------------------

def expert_ffn(x, w_up, b_up, w_down, b_down, *, activation="silu",
               compute_dtype=None, tile_m=None, tile_ff=None):
    """x: [..., d_model] -> [..., d_model] (same dtype as x)."""
    orig_shape = x.shape
    d_model = orig_shape[-1]
    d_ff = w_up.shape[1]
    assert w_up.shape == (d_model, d_ff)
    assert w_down.shape == (d_ff, d_model)

    out_dtype = x.dtype
    if compute_dtype is None:
        # f32 callers get a bf16 MXU path (f32 accumulation); others unchanged.
        compute_dtype = jnp.bfloat16 if x.dtype == jnp.float32 else x.dtype
    compute_dtype = jnp.dtype(compute_dtype)

    x2 = x.reshape(-1, d_model).astype(compute_dtype)
    T = x2.shape[0]
    w_up_c = jnp.asarray(w_up).astype(compute_dtype)
    w_down_c = jnp.asarray(w_down).astype(compute_dtype)
    b_up2 = jnp.asarray(b_up).reshape(1, d_ff).astype(jnp.float32)
    b_down2 = jnp.asarray(b_down).reshape(1, d_model).astype(jnp.float32)

    c_item = compute_dtype.itemsize
    o_item = jnp.dtype(out_dtype).itemsize

    # Lane dims padded to 128-multiples (lane-dense, unmasked loads/stores).
    dmp = _round_up(d_model, 128)
    dffp0 = _round_up(d_ff, 128)

    cap, multi_tc = _tpu_info()
    budget = int(cap * 0.70)
    plan = _plan(T, dmp, dffp0, c_item, o_item, budget, multi_tc,
                 tile_m, tile_ff)
    tm, tf, dffp = plan["tile_m"], plan["tile_ff"], plan["dffp"]
    Tp = _round_up(T, tm)

    # Zero padding keeps semantics exact: padded d_ff columns give act(0)=0
    # and meet zero W_down rows; padded d_model / token slots are sliced off.
    x_p = x2
    if (Tp, dmp) != (T, d_model):
        x_p = jnp.pad(x2, ((0, Tp - T), (0, dmp - d_model)))
    w_up_p = w_up_c
    if (dmp, dffp) != (d_model, d_ff):
        w_up_p = jnp.pad(w_up_c, ((0, dmp - d_model), (0, dffp - d_ff)))
    b_up_p = b_up2 if dffp == d_ff else jnp.pad(b_up2, ((0, 0), (0, dffp - d_ff)))
    w_down_p = w_down_c
    if (dffp, dmp) != (d_ff, d_model):
        w_down_p = jnp.pad(w_down_c, ((0, dffp - d_ff), (0, dmp - d_model)))
    b_down_p = (b_down2 if dmp == d_model
                else jnp.pad(b_down2, ((0, 0), (0, dmp - d_model))))

    if plan["mode"] == "resident":
        # Weights/biases have constant block indices: DMA'd once, reused for
        # every token tile.  Single-buffer them only if needed for the budget.
        wsb = plan["weight_single_buffer"]
        grid = (Tp // tm,)
        kernel = functools.partial(expert_ffn_resident_kernel,
                                   activation=activation)
        in_specs = [
            pl.BlockSpec((tm, dmp), lambda i: (i, 0)),        # x
            _spec((dmp, dffp), lambda i: (0, 0), wsb),        # W_up (resident)
            _spec((1, dffp), lambda i: (0, 0), wsb),          # b_up
            _spec((dffp, dmp), lambda i: (0, 0), wsb),        # W_down (resident)
            _spec((1, dmp), lambda i: (0, 0), wsb),           # b_down
        ]
        out_specs = pl.BlockSpec((tm, dmp), lambda i: (i, 0))
        scratch_shapes = []
        dim_sem = ("parallel",)
        n_weight_passes = 1
    else:
        # Streamed weights: d_ff chunks innermost ("arbitrary" reduction axis),
        # f32 accumulator scratch resident across it.  x / out / b_down are
        # constant across the inner axis; single-buffer them only when needed.
        iosb = plan["io_single_buffer"]
        grid = (Tp // tm, dffp // tf)
        kernel = functools.partial(expert_ffn_streamed_kernel,
                                   activation=activation)
        in_specs = [
            _spec((tm, dmp), lambda i, f: (i, 0), iosb),      # x
            pl.BlockSpec((dmp, tf), lambda i, f: (0, f)),     # W_up chunk
            pl.BlockSpec((1, tf), lambda i, f: (0, f)),       # b_up chunk
            pl.BlockSpec((tf, dmp), lambda i, f: (f, 0)),     # W_down chunk
            _spec((1, dmp), lambda i, f: (0, 0), iosb),       # b_down
        ]
        out_specs = _spec((tm, dmp), lambda i, f: (i, 0), iosb)
        scratch_shapes = [pltpu.VMEM((tm, dmp), jnp.float32)]
        dim_sem = ("parallel", "arbitrary")
        n_weight_passes = Tp // tm

    flops = 4 * Tp * dmp * dffp                       # two matmuls
    transcendentals = Tp * dffp if activation in ("silu", "gelu") else 0
    bytes_accessed = (Tp * dmp * (c_item + o_item)                  # x + out
                      + n_weight_passes * 2 * dmp * dffp * c_item   # weights
                      + (dffp + dmp) * 4)                           # biases
    cost = pl.CostEstimate(flops=int(flops),
                           transcendentals=int(transcendentals),
                           bytes_accessed=int(bytes_accessed))

    out = pl.pallas_call(
        kernel,
        out_shape=jax.ShapeDtypeStruct((Tp, dmp), out_dtype),
        grid_spec=pltpu.PrefetchScalarGridSpec(
            num_scalar_prefetch=0,
            grid=grid,
            in_specs=in_specs,
            out_specs=out_specs,
            scratch_shapes=scratch_shapes,
        ),
        compiler_params=pltpu.CompilerParams(
            dimension_semantics=dim_sem,
            vmem_limit_bytes=int(cap * 0.85),
        ),
        cost_estimate=cost,
    )(x_p, w_up_p, b_up_p, w_down_p, b_down_p)

    return out[:T, :d_model].reshape(orig_shape)


# ---------------------------------------------------------------------------
# Parameter init (mimics nn.Linear uniform +-1/sqrt(fan_in)); pre-transposed.
# ---------------------------------------------------------------------------

def init_expert_ffn_params(key, d_model, d_ff, dtype=jnp.float32):
    k1, k2, k3, k4 = jax.random.split(key, 4)
    bound_up = 1.0 / (d_model ** 0.5)
    bound_down = 1.0 / (d_ff ** 0.5)
    w_up = jax.random.uniform(k1, (d_model, d_ff), dtype,
                              minval=-bound_up, maxval=bound_up)
    b_up = jax.random.uniform(k2, (1, d_ff), dtype,
                              minval=-bound_up, maxval=bound_up)
    w_down = jax.random.uniform(k3, (d_ff, d_model), dtype,
                                minval=-bound_down, maxval=bound_down)
    b_down = jax.random.uniform(k4, (1, d_model), dtype,
                                minval=-bound_down, maxval=bound_down)
    return w_up, b_up, w_down, b_down


if __name__ == "__main__":
    # Small shapes consistent with the module: x = [batch, seq, d_model].
    batch, seq, d_model, d_ff = 2, 8, 32, 256
    key = jax.random.PRNGKey(0)
    kx, kp = jax.random.split(key)

    x = jax.random.normal(kx, (batch, seq, d_model), jnp.float32)
    w_up, b_up, w_down, b_down = init_expert_ffn_params(kp, d_model, d_ff)

    # Pure-JAX f32 reference (exact sigmoid / exact silu).
    h_ref = x @ w_up + b_up.reshape(-1)
    h_ref = h_ref * jax.nn.sigmoid(h_ref)
    out_ref = h_ref @ w_down + b_down.reshape(-1)

    # 1) Default plan (resident weights, bf16 compute path for f32 inputs).
    out1 = jax.block_until_ready(
        expert_ffn(x, w_up, b_up, w_down, b_down, activation="silu"))
    # 2) Forced streamed/accumulator plan (tile_ff=128 -> 2 d_ff chunks).
    out2 = jax.block_until_ready(
        expert_ffn(x, w_up, b_up, w_down, b_down, activation="silu",
                   tile_ff=128))
    # 3) Full-precision compute path.
    out3 = jax.block_until_ready(
        expert_ffn(x, w_up, b_up, w_down, b_down, activation="silu",
                   compute_dtype=jnp.float32))

    assert out1.shape == x.shape and out1.dtype == x.dtype
    e1 = float(jnp.max(jnp.abs(out1 - out_ref)))
    e2 = float(jnp.max(jnp.abs(out2 - out_ref)))
    e3 = float(jnp.max(jnp.abs(out3 - out_ref)))
    e12 = float(jnp.max(jnp.abs(out1 - out2)))
    # bf16-compute paths vs f32 reference: loose tolerance for bf16 rounding.
    assert jnp.allclose(out1, out_ref, atol=5e-2, rtol=5e-2), e1
    assert jnp.allclose(out2, out_ref, atol=5e-2, rtol=5e-2), e2
    assert jnp.allclose(out3, out_ref, atol=5e-2, rtol=5e-2), e3
    # Resident vs streamed plans use identical compute dtype: must agree.
    assert jnp.allclose(out1, out2, atol=5e-3, rtol=5e-3), e12

    print("KERNEL_OK")
</pallas_src>

<mosaic_0001>
module attributes {stable_mosaic.version = 11 : i64} {
  func.func @expert_ffn_resident_kernel(%arg0: i32, %arg1: memref<16x128xbf16, #tpu.memory_space<vmem>>, %arg2: memref<128x256xbf16, #tpu.memory_space<vmem>>, %arg3: memref<1x256xf32, #tpu.memory_space<vmem>>, %arg4: memref<256x128xbf16, #tpu.memory_space<vmem>>, %arg5: memref<1x128xf32, #tpu.memory_space<vmem>>, %arg6: memref<16x128xf32, #tpu.memory_space<vmem>>) attributes {dimension_semantics = [#tpu.dimension_semantics<parallel>], iteration_bounds = array<i64: 1>, scalar_prefetch = 0 : i64, scratch_operands = 0 : i64, tpu.core_type = #tpu.core_type<tc>, window_params = [{transform_indices = @transform_0, window_bounds = array<i64: 16, 128>}, {pipeline_mode = #tpu.pipeline_mode<synchronous>, transform_indices = @transform_1, window_bounds = array<i64: 128, 256>}, {pipeline_mode = #tpu.pipeline_mode<synchronous>, transform_indices = @transform_2, window_bounds = array<i64: 1, 256>}, {pipeline_mode = #tpu.pipeline_mode<synchronous>, transform_indices = @transform_3, window_bounds = array<i64: 256, 128>}, {pipeline_mode = #tpu.pipeline_mode<synchronous>, transform_indices = @transform_4, window_bounds = array<i64: 1, 128>}, {transform_indices = @transform_5, window_bounds = array<i64: 16, 128>}]} {
    %c0 = arith.constant 0 : index
    %c0_0 = arith.constant 0 : index
    %0 = vector.load %arg1[%c0, %c0_0] : memref<16x128xbf16, #tpu.memory_space<vmem>>, vector<16x128xbf16>
    %c0_1 = arith.constant 0 : index
    %c0_2 = arith.constant 0 : index
    %1 = vector.load %arg2[%c0_1, %c0_2] : memref<128x256xbf16, #tpu.memory_space<vmem>>, vector<128x256xbf16>
    %cst = arith.constant dense<0.000000e+00> : vector<16x256xf32>
    %2 = tpu.matmul %0, %1, %cst {dimension_numbers = #tpu.dot_dimension_numbers<[1], [0], [0], [1], [0, 0, 1, 1], [], []>} : vector<16x128xbf16>, vector<128x256xbf16>, vector<16x256xf32> -> vector<16x256xf32>
    %c0_3 = arith.constant 0 : index
    %c0_4 = arith.constant 0 : index
    %3 = vector.load %arg3[%c0_3, %c0_4] : memref<1x256xf32, #tpu.memory_space<vmem>>, vector<1x256xf32>
    %4 = vector.broadcast %3 : vector<1x256xf32> to vector<16x256xf32>
    %5 = arith.addf %2, %4 : vector<16x256xf32>
    %cst_5 = arith.constant 5.000000e-01 : f32
    %6 = vector.broadcast %cst_5 : f32 to vector<16x256xf32>
    %7 = arith.mulf %6, %5 : vector<16x256xf32>
    %cst_6 = arith.constant 5.000000e-01 : f32
    %8 = vector.broadcast %cst_6 : f32 to vector<16x256xf32>
    %9 = arith.mulf %8, %5 : vector<16x256xf32>
    %10 = math.tanh %9 : vector<16x256xf32>
    %cst_7 = arith.constant 1.000000e+00 : f32
    %11 = vector.broadcast %cst_7 : f32 to vector<16x256xf32>
    %12 = arith.addf %11, %10 : vector<16x256xf32>
    %13 = arith.mulf %7, %12 : vector<16x256xf32>
    %14 = arith.truncf %13 : vector<16x256xf32> to vector<16x256xbf16>
    %c0_8 = arith.constant 0 : index
    %c0_9 = arith.constant 0 : index
    %15 = vector.load %arg4[%c0_8, %c0_9] : memref<256x128xbf16, #tpu.memory_space<vmem>>, vector<256x128xbf16>
    %cst_10 = arith.constant dense<0.000000e+00> : vector<16x128xf32>
    %16 = tpu.matmul %14, %15, %cst_10 {dimension_numbers = #tpu.dot_dimension_numbers<[1], [0], [0], [1], [0, 0, 1, 1], [], []>} : vector<16x256xbf16>, vector<256x128xbf16>, vector<16x128xf32> -> vector<16x128xf32>
    %c0_11 = arith.constant 0 : index
    %c0_12 = arith.constant 0 : index
    %17 = vector.load %arg5[%c0_11, %c0_12] : memref<1x128xf32, #tpu.memory_space<vmem>>, vector<1x128xf32>
    %18 = vector.broadcast %17 : vector<1x128xf32> to vector<16x128xf32>
    %19 = arith.addf %16, %18 : vector<16x128xf32>
    %c0_13 = arith.constant 0 : index
    %c0_14 = arith.constant 0 : index
    %20 = vector.load %arg6[%c0_13, %c0_14] : memref<16x128xf32, #tpu.memory_space<vmem>>, vector<16x128xf32>
    tpu.vector_store %arg6[%c0_13, %c0_14], %19 {strides = array<i32>} : memref<16x128xf32, #tpu.memory_space<vmem>>, vector<16x128xf32>,
    return
  }
  func.func @transform_0(%arg0: i32) -> (i32, i32) {
    %c0_i32 = arith.constant 0 : i32
    %c0_i32_0 = arith.constant 0 : i32
    return %arg0, %c0_i32 : i32, i32
  }
  func.func @transform_1(%arg0: i32) -> (i32, i32) {
    %c0_i32 = arith.constant 0 : i32
    %c0_i32_0 = arith.constant 0 : i32
    %c0_i32_1 = arith.constant 0 : i32
    return %c0_i32, %c0_i32_0 : i32, i32
  }
  func.func @transform_2(%arg0: i32) -> (i32, i32) {
    %c0_i32 = arith.constant 0 : i32
    %c0_i32_0 = arith.constant 0 : i32
    %c0_i32_1 = arith.constant 0 : i32
    return %c0_i32, %c0_i32_0 : i32, i32
  }
  func.func @transform_3(%arg0: i32) -> (i32, i32) {
    %c0_i32 = arith.constant 0 : i32
    %c0_i32_0 = arith.constant 0 : i32
    %c0_i32_1 = arith.constant 0 : i32
    return %c0_i32, %c0_i32_0 : i32, i32
  }
  func.func @transform_4(%arg0: i32) -> (i32, i32) {
    %c0_i32 = arith.constant 0 : i32
    %c0_i32_0 = arith.constant 0 : i32
    %c0_i32_1 = arith.constant 0 : i32
    return %c0_i32, %c0_i32_0 : i32, i32
  }
  func.func @transform_5(%arg0: i32) -> (i32, i32) {
    %c0_i32 = arith.constant 0 : i32
    %c0_i32_0 = arith.constant 0 : i32
    return %arg0, %c0_i32 : i32, i32
  }
}

</mosaic_0001>

<llo_original>
// kernel: tpu_custom_call.1
$region0: #{tpu_custom_call.1}
  #allocation0 [shape = 'u32[]', space=smem, size = 0x4, offset = 0x4, fixed_abs, tag = 'smem constant byte address 0x4 - core index']
  #allocation1 [shape = 'u32[144,128]{1,0:T(1,128)}', space=vmem, size = 0x12000, scoped, tag = 'internal scratch']
  %s0 = inlined_call_operand.hbm [shape: bf16[16,128], index: 0, kind: input, shape index: {}]
  %s1 = inlined_call_operand.hbm [shape: bf16[128,256], index: 1, kind: input, shape index: {}]
  %s2 = inlined_call_operand.vmem [shape: f32[1,256], index: 2, kind: input, shape index: {}]
  %s3 = inlined_call_operand.hbm [shape: bf16[256,128], index: 3, kind: input, shape index: {}]
  %s4 = inlined_call_operand.vmem [shape: f32[1,128], index: 4, kind: input, shape index: {}]
  %s5 = inlined_call_operand.hbm [shape: f32[16,128], index: 5, kind: output, shape index: {}]
  %s6 = sld [smem:[#allocation0]]
  $region42: #{tpu_custom_call.1} parent=0
    _
  %s8 = ssub.s32 1, %s6
  %s9 = scalar_select 0, %s8, %s6
  $region1: #{tpu_custom_call.1} parent=0
    #allocation2 [shape = 'u8[4096]{0}', space=vmem, size = 0x1000, scoped, tag = 'input window, operand 0, single buffered']
    #allocation3 [shape = 's32[1]{0}', space=sflag, size = 0x4, scoped, tag = 'scoped memory for tpu_custom_call.1']
    #allocation4 [shape = 's32[1]{0}', space=sflag, size = 0x4, scoped, tag = 'scoped memory for tpu_custom_call.1']
    #allocation5 [shape = 'u8[65536]{0}', space=vmem, size = 0x10000, scoped, tag = 'input window, operand 1, single buffered']
    #allocation6 [shape = 's32[1]{0}', space=sflag, size = 0x4, scoped, tag = 'scoped memory for tpu_custom_call.1']
    #allocation7 [shape = 'u8[65536]{0}', space=vmem, size = 0x10000, scoped, tag = 'input window, operand 3, single buffered']
    #allocation8 [shape = 'u8[8192]{0}', space=vmem, size = 0x2000, scoped, tag = 'output window, operand 0, single buffered']
    %10 = vsyncpa [#allocation3], 0
    %11 = vsyncpa [#allocation6], 0
    %12 = vsyncpa [#allocation4], 0
    // Predicated region
    $region2: #{tpu_custom_call.1} parent=1 // pred_check
      _
    $region3: #{tpu_custom_call.1} parent=1 // pred_check_branch
      %14 = sbr.rel (0) target = $region5
    $region4: #{tpu_custom_call.1} parent=1 // pred_region
      %s16 = ssub.s32 128, 128
      %17 = vsyncadd [#allocation3], %s16
      %s18 = sshll.u32 [#allocation2], 4
      %s19 = int_to_ptr.vmem [resolvable:$true] %s18
      %24 = dma.hbm_to_vmem [thread:$0]  %s0, 128, %s19, [#allocation3], 64, 64, 4
    $region5: #{tpu_custom_call.1} parent=1 // pred_fallthru
      _
    // Predicated region
    $region6: #{tpu_custom_call.1} parent=1 // pred_check
      _
    $region7: #{tpu_custom_call.1} parent=1 // pred_check_branch
      %26 = sbr.rel (0) target = $region9
    $region8: #{tpu_custom_call.1} parent=1 // pred_region
      %s28 = ssub.s32 2048, 2048
      %29 = vsyncadd [#allocation6], %s28
      %s30 = sshll.u32 [#allocation5], 4
      %s31 = int_to_ptr.vmem [resolvable:$true] %s30
      %36 = dma.hbm_to_vmem [thread:$0]  %s1, 2048, %s31, [#allocation6], 128, 128, 8
    $region9: #{tpu_custom_call.1} parent=1 // pred_fallthru
      _
    // Predicated region
    $region10: #{tpu_custom_call.1} parent=1 // pred_check
      _
    $region11: #{tpu_custom_call.1} parent=1 // pred_check_branch
      %38 = sbr.rel (0) target = $region13
    $region12: #{tpu_custom_call.1} parent=1 // pred_region
      _
    $region13: #{tpu_custom_call.1} parent=1 // pred_fallthru
      _
    // Predicated region
    $region14: #{tpu_custom_call.1} parent=1 // pred_check
      _
    $region15: #{tpu_custom_call.1} parent=1 // pred_check_branch
      %40 = sbr.rel (0) target = $region17
    $region16: #{tpu_custom_call.1} parent=1 // pred_region
      %s42 = ssub.s32 2048, 2048
      %43 = vsyncadd [#allocation6], %s42
      %s44 = sshll.u32 [#allocation7], 4
      %s45 = int_to_ptr.vmem [resolvable:$true] %s44
      %50 = dma.hbm_to_vmem [thread:$0]  %s3, 2048, %s45, [#allocation6], 64, 64, 4
    $region17: #{tpu_custom_call.1} parent=1 // pred_fallthru
      _
    // Predicated region
    $region18: #{tpu_custom_call.1} parent=1 // pred_check
      _
    $region19: #{tpu_custom_call.1} parent=1 // pred_check_branch
      %52 = sbr.rel (0) target = $region21
    $region20: #{tpu_custom_call.1} parent=1 // pred_region
      _
    $region21: #{tpu_custom_call.1} parent=1 // pred_fallthru
      _
    // Predicated region
    $region22: #{tpu_custom_call.1} parent=1 // pred_check
      _
    $region23: #{tpu_custom_call.1} parent=1 // pred_check_branch
      %54 = sbr.rel (0) target = $region25
    $region24: #{tpu_custom_call.1} parent=1 // pred_region
      %55 = dma.done [#allocation3], 128
    $region25: #{tpu_custom_call.1} parent=1 // pred_fallthru
      _
    // Predicated region
    $region26: #{tpu_custom_call.1} parent=1 // pred_check
      _
    $region27: #{tpu_custom_call.1} parent=1 // pred_check_branch
      %57 = sbr.rel (0) target = $region29
    $region28: #{tpu_custom_call.1} parent=1 // pred_region
      %58 = dma.done [#allocation6], 2048
    $region29: #{tpu_custom_call.1} parent=1 // pred_fallthru
      _
    // Predicated region
    $region30: #{tpu_custom_call.1} parent=1 // pred_check
      _
    $region31: #{tpu_custom_call.1} parent=1 // pred_check_branch
      %60 = sbr.rel (0) target = $region33
    $region32: #{tpu_custom_call.1} parent=1 // pred_region
      %61 = dma.done [#allocation6], 2048
    $region33: #{tpu_custom_call.1} parent=1 // pred_fallthru
      _
    %v63 = vld [vmem:[#allocation2] sm:$0xf]
    %v64 = vld [vmem:[#allocation2 + $0x4] sm:$0xf]
    %v65 = vld [vmem:[#allocation5] sm:$0xff]
    %v66 = vld [vmem:[#allocation5 + $0x8] sm:$0xff]
    %v67 = vld [vmem:[#allocation5 + $0x10] sm:$0xff]
    %v68 = vld [vmem:[#allocation5 + $0x18] sm:$0xff]
    %v69 = vld [vmem:[#allocation5 + $0x20] sm:$0xff]
    %v70 = vld [vmem:[#allocation5 + $0x28] sm:$0xff]
    %v71 = vld [vmem:[#allocation5 + $0x30] sm:$0xff]
    %v72 = vld [vmem:[#allocation5 + $0x38] sm:$0xff]
    %v73 = vld [vmem:[#allocation5 + $0x40] sm:$0xff]
    %v74 = vld [vmem:[#allocation5 + $0x48] sm:$0xff]
    %v75 = vld [vmem:[#allocation5 + $0x50] sm:$0xff]
    %v76 = vld [vmem:[#allocation5 + $0x58] sm:$0xff]
    %v77 = vld [vmem:[#allocation5 + $0x60] sm:$0xff]
    %v78 = vld [vmem:[#allocation5 + $0x68] sm:$0xff]
    %v79 = vld [vmem:[#allocation5 + $0x70] sm:$0xff]
    %v80 = vld [vmem:[#allocation5 + $0x78] sm:$0xff]
    %v81 = vld [vmem:[%s2] sm:$0x3]
    %v83 = vlaneseq
    %v84 = vshrl.u32 %v83, 7
    %v85 = vsub.s32 0, %v84
    %v86 = vrot.slane %v81, %v85
    %v87 = vlaneseq
    %v88 = vshrl.u32 %v87, 7
    %v89 = vsub.s32 1, %v88
    %v90 = vrot.slane %v81, %v89
    %v95 = vunpack.c.l.b16 %v63
    %v96 = vunpack.c.l.b16 %v64
    %v97 = vpack.c.b16 %v96, %v95
    %v115 = vunpack.c.l.b16 %v65
    %v116 = vunpack.c.h.b16 %v65
    %v117 = vunpack.c.l.b16 %v66
    %v118 = vunpack.c.h.b16 %v66
    %v119 = vunpack.c.l.b16 %v67
    %v120 = vunpack.c.h.b16 %v67
    %v121 = vunpack.c.l.b16 %v68
    %v122 = vunpack.c.h.b16 %v68
    %v123 = vunpack.c.l.b16 %v69
    %v124 = vunpack.c.h.b16 %v69
    %v125 = vunpack.c.l.b16 %v70
    %v126 = vunpack.c.h.b16 %v70
    %v127 = vunpack.c.l.b16 %v71
    %v128 = vunpack.c.h.b16 %v71
    %v129 = vunpack.c.l.b16 %v72
    %v130 = vunpack.c.h.b16 %v72
    %v131 = vunpack.c.l.b16 %v73
    %v132 = vunpack.c.h.b16 %v73
    %v133 = vunpack.c.l.b16 %v74
    %v134 = vunpack.c.h.b16 %v74
    %v135 = vunpack.c.l.b16 %v75
    %v136 = vunpack.c.h.b16 %v75
    %v137 = vunpack.c.l.b16 %v76
    %v138 = vunpack.c.h.b16 %v76
    %v139 = vunpack.c.l.b16 %v77
    %v140 = vunpack.c.h.b16 %v77
    %v141 = vunpack.c.l.b16 %v78
    %v142 = vunpack.c.h.b16 %v78
    %v143 = vunpack.c.l.b16 %v79
    %v144 = vunpack.c.h.b16 %v79
    %v145 = vunpack.c.l.b16 %v80
    %v146 = vunpack.c.h.b16 %v80
    %v147 = vpack.c.b16 %v117, %v115
    %v148 = vpack.c.b16 %v118, %v116
    %v149 = vpack.c.b16 %v121, %v119
    %v150 = vpack.c.b16 %v122, %v120
    %v151 = vpack.c.b16 %v125, %v123
    %v152 = vpack.c.b16 %v126, %v124
    %v153 = vpack.c.b16 %v129, %v127
    %v154 = vpack.c.b16 %v130, %v128
    %v155 = vpack.c.b16 %v133, %v131
    %v156 = vpack.c.b16 %v134, %v132
    %v157 = vpack.c.b16 %v137, %v135
    %v158 = vpack.c.b16 %v138, %v136
    %v159 = vpack.c.b16 %v141, %v139
    %v160 = vpack.c.b16 %v142, %v140
    %v161 = vpack.c.b16 %v145, %v143
    %v162 = vpack.c.b16 %v146, %v144
    %179 = vmatprep.subr.bf16.mxu0 %v148
    %180 = vmatpush1.bf16.msra.mxu0 %v147
    %181 = vmatprep.subr.bf16.mxu0 %v150
    %182 = vmatpush1.bf16.msra.mxu0 %v149
    %183 = vmatprep.subr.bf16.mxu0 %v152
    %184 = vmatpush1.bf16.msra.mxu0 %v151
    %185 = vmatprep.subr.bf16.mxu0 %v154
    %186 = vmatpush1.bf16.msra.mxu0 %v153
    %187 = vmatprep.subr.bf16.mxu0 %v156
    %188 = vmatpush1.bf16.msra.mxu0 %v155
    %189 = vmatprep.subr.bf16.mxu0 %v158
    %190 = vmatpush1.bf16.msra.mxu0 %v157
    %191 = vmatprep.subr.bf16.mxu0 %v160
    %192 = vmatpush1.bf16.msra.mxu0 %v159
    %193 = vmatprep.subr.bf16.mxu0 %v162
    %194 = vmatpush1.bf16.msra.mxu0 %v161
    %195 = vmatprep.subr.bf16.mxu0 0
    %196 = vmatpush1.bf16.msra.mxu0 0
    %197 = vmatprep.subr.bf16.mxu0 0
    %198 = vmatpush1.bf16.msra.mxu0 0
    %199 = vmatprep.subr.bf16.mxu0 0
    %200 = vmatpush1.bf16.msra.mxu0 0
    %201 = vmatprep.subr.bf16.mxu0 0
    %202 = vmatpush1.bf16.msra.mxu0 0
    %203 = vmatprep.subr.bf16.mxu0 0
    %204 = vmatpush1.bf16.msra.mxu0 0
    %205 = vmatprep.subr.bf16.mxu0 0
    %206 = vmatpush1.bf16.msra.mxu0 0
    %207 = vmatprep.subr.bf16.mxu0 0
    %208 = vmatpush1.bf16.msra.mxu0 0
    %209 = vmatprep.subr.bf16.mxu0 0
    %210 = vmatpush1.bf16.msra.mxu0 0
    %211 = vmatprep.mubr.bf16.mxu0 0
    %212 = vmatmul.mubr.bf16.gmra.mrb[0].mxu0 %v97
    %v213 = vpop.f32.mrb[0].mxu0
    %v214 = vadd.f32 %v86, %v213
    %v215 = vpop.f32.mrb[0].mxu0
    %v216 = vadd.f32 %v90, %v215
    %v217 = vpop.f32.mrb[0].mxu0
    %v218 = vadd.f32 %v86, %v217
    %v219 = vpop.f32.mrb[0].mxu0
    %v220 = vadd.f32 %v90, %v219
    %221 = vdwg.mxu0
    %v222 = vmul.f32 %v214, 0.5
    %v223 = vmul.f32 %v216, 0.5
    %v224 = vmul.f32 %v218, 0.5
    %v225 = vmul.f32 %v220, 0.5
    %v226 = vtanh.pop %v222
    %v227 = vtanh.pop %v223
    %v228 = vtanh.pop %v224
    %v229 = vtanh.pop %v225
    %v230 = vadd.f32 %v226, 1.0
    %v231 = vadd.f32 %v227, 1.0
    %v232 = vadd.f32 %v228, 1.0
    %v233 = vadd.f32 %v229, 1.0
    %v234 = vmul.f32 %v222, %v230
    %v235 = vmul.f32 %v223, %v231
    %v236 = vmul.f32 %v224, %v232
    %v237 = vmul.f32 %v225, %v233
    %v238 = vpack.c.bf16 %v236, %v234
    %v239 = vpack.c.bf16 %v237, %v235
    %v240 = vld [vmem:[#allocation7] sm:$0xf]
    %v241 = vld [vmem:[#allocation7 + $0x4] sm:$0xf]
    %v242 = vld [vmem:[#allocation7 + $0x8] sm:$0xf]
    %v243 = vld [vmem:[#allocation7 + $0xc] sm:$0xf]
    %v244 = vld [vmem:[#allocation7 + $0x10] sm:$0xf]
    %v245 = vld [vmem:[#allocation7 + $0x14] sm:$0xf]
    %v246 = vld [vmem:[#allocation7 + $0x18] sm:$0xf]
    %v247 = vld [vmem:[#allocation7 + $0x1c] sm:$0xf]
    %v248 = vld [vmem:[#allocation7 + $0x20] sm:$0xf]
    %v249 = vld [vmem:[#allocation7 + $0x24] sm:$0xf]
    %v250 = vld [vmem:[#allocation7 + $0x28] sm:$0xf]
    %v251 = vld [vmem:[#allocation7 + $0x2c] sm:$0xf]
    %v252 = vld [vmem:[#allocation7 + $0x30] sm:$0xf]
    %v253 = vld [vmem:[#allocation7 + $0x34] sm:$0xf]
    %v254 = vld [vmem:[#allocation7 + $0x38] sm:$0xf]
    %v255 = vld [vmem:[#allocation7 + $0x3c] sm:$0xf]
    %v256 = vld [vmem:[#allocation7 + $0x40] sm:$0xf]
    %v257 = vld [vmem:[#allocation7 + $0x44] sm:$0xf]
    %v258 = vld [vmem:[#allocation7 + $0x48] sm:$0xf]
    %v259 = vld [vmem:[#allocation7 + $0x4c] sm:$0xf]
    %v260 = vld [vmem:[#allocation7 + $0x50] sm:$0xf]
    %v261 = vld [vmem:[#allocation7 + $0x54] sm:$0xf]
    %v262 = vld [vmem:[#allocation7 + $0x58] sm:$0xf]
    %v263 = vld [vmem:[#allocation7 + $0x5c] sm:$0xf]
    %v264 = vld [vmem:[#allocation7 + $0x60] sm:$0xf]
    %v265 = vld [vmem:[#allocation7 + $0x64] sm:$0xf]
    %v266 = vld [vmem:[#allocation7 + $0x68] sm:$0xf]
    %v267 = vld [vmem:[#allocation7 + $0x6c] sm:$0xf]
    %v268 = vld [vmem:[#allocation7 + $0x70] sm:$0xf]
    %v269 = vld [vmem:[#allocation7 + $0x74] sm:$0xf]
    %v270 = vld [vmem:[#allocation7 + $0x78] sm:$0xf]
    %v271 = vld [vmem:[#allocation7 + $0x7c] sm:$0xf]
    %v272 = vld [vmem:[%s4] sm:$0x1]
    %v274 = vlaneseq
    %v275 = vshrl.u32 %v274, 7
    %v276 = vsub.s32 0, %v275
    %v277 = vrot.slane %v272, %v276
    %v311 = vunpack.c.l.b16 %v240
    %v312 = vunpack.c.l.b16 %v241
    %v313 = vunpack.c.l.b16 %v242
    %v314 = vunpack.c.l.b16 %v243
    %v315 = vunpack.c.l.b16 %v244
    %v316 = vunpack.c.l.b16 %v245
    %v317 = vunpack.c.l.b16 %v246
    %v318 = vunpack.c.l.b16 %v247
    %v319 = vunpack.c.l.b16 %v248
    %v320 = vunpack.c.l.b16 %v249
    %v321 = vunpack.c.l.b16 %v250
    %v322 = vunpack.c.l.b16 %v251
    %v323 = vunpack.c.l.b16 %v252
    %v324 = vunpack.c.l.b16 %v253
    %v325 = vunpack.c.l.b16 %v254
    %v326 = vunpack.c.l.b16 %v255
    %v327 = vunpack.c.l.b16 %v256
    %v328 = vunpack.c.l.b16 %v257
    %v329 = vunpack.c.l.b16 %v258
    %v330 = vunpack.c.l.b16 %v259
    %v331 = vunpack.c.l.b16 %v260
    %v332 = vunpack.c.l.b16 %v261
    %v333 = vunpack.c.l.b16 %v262
    %v334 = vunpack.c.l.b16 %v263
    %v335 = vunpack.c.l.b16 %v264
    %v336 = vunpack.c.l.b16 %v265
    %v337 = vunpack.c.l.b16 %v266
    %v338 = vunpack.c.l.b16 %v267
    %v339 = vunpack.c.l.b16 %v268
    %v340 = vunpack.c.l.b16 %v269
    %v341 = vunpack.c.l.b16 %v270
    %v342 = vunpack.c.l.b16 %v271
    %v343 = vpack.c.b16 %v312, %v311
    %v344 = vpack.c.b16 %v314, %v313
    %v345 = vpack.c.b16 %v316, %v315
    %v346 = vpack.c.b16 %v318, %v317
    %v347 = vpack.c.b16 %v320, %v319
    %v348 = vpack.c.b16 %v322, %v321
    %v349 = vpack.c.b16 %v324, %v323
    %v350 = vpack.c.b16 %v326, %v325
    %v351 = vpack.c.b16 %v328, %v327
    %v352 = vpack.c.b16 %v330, %v329
    %v353 = vpack.c.b16 %v332, %v331
    %v354 = vpack.c.b16 %v334, %v333
    %v355 = vpack.c.b16 %v336, %v335
    %v356 = vpack.c.b16 %v338, %v337
    %v357 = vpack.c.b16 %v340, %v339
    %v358 = vpack.c.b16 %v342, %v341
    %375 = vmatprep.subr.bf16.mxu0 0
    %376 = vmatpush1.bf16.msra.mxu0 %v343
    %377 = vmatprep.subr.bf16.mxu0 0
    %378 = vmatpush1.bf16.msra.mxu0 %v344
    %379 = vmatprep.subr.bf16.mxu0 0
    %380 = vmatpush1.bf16.msra.mxu0 %v345
    %381 = vmatprep.subr.bf16.mxu0 0
    %382 = vmatpush1.bf16.msra.mxu0 %v346
    %383 = vmatprep.subr.bf16.mxu0 0
    %384 = vmatpush1.bf16.msra.mxu0 %v347
    %385 = vmatprep.subr.bf16.mxu0 0
    %386 = vmatpush1.bf16.msra.mxu0 %v348
    %387 = vmatprep.subr.bf16.mxu0 0
    %388 = vmatpush1.bf16.msra.mxu0 %v349
    %389 = vmatprep.subr.bf16.mxu0 0
    %390 = vmatpush1.bf16.msra.mxu0 %v350
    %391 = vmatprep.subr.bf16.mxu0 0
    %392 = vmatpush1.bf16.msra.mxu0 %v351
    %393 = vmatprep.subr.bf16.mxu0 0
    %394 = vmatpush1.bf16.msra.mxu0 %v352
    %395 = vmatprep.subr.bf16.mxu0 0
    %396 = vmatpush1.bf16.msra.mxu0 %v353
    %397 = vmatprep.subr.bf16.mxu0 0
    %398 = vmatpush1.bf16.msra.mxu0 %v354
    %399 = vmatprep.subr.bf16.mxu0 0
    %400 = vmatpush1.bf16.msra.mxu0 %v355
    %401 = vmatprep.subr.bf16.mxu0 0
    %402 = vmatpush1.bf16.msra.mxu0 %v356
    %403 = vmatprep.subr.bf16.mxu0 0
    %404 = vmatpush1.bf16.msra.mxu0 %v357
    %405 = vmatprep.subr.bf16.mxu0 0
    %406 = vmatpush1.bf16.msra.mxu0 %v358
    %407 = vmatprep.mubr.bf16.mxu0 %v239
    %408 = vmatmul.mubr.bf16.gmra.mrb[0].mxu0 %v238
    %v409 = vpop.f32.mrb[0].mxu0
    %v410 = vadd.f32 %v277, %v409
    %v411 = vpop.f32.mrb[0].mxu0
    %v412 = vpop.f32.mrb[0].mxu0
    %v413 = vadd.f32 %v277, %v412
    %v414 = vpop.f32.mrb[0].mxu0
    %415 = vdwg.mxu0
    %416 = vst [vmem:[#allocation8] sm:$0xff] %v410
    %417 = vst [vmem:[#allocation8 + $0x8] sm:$0xff] %v413
    // Predicated region
    $region34: #{tpu_custom_call.1} parent=1 // pred_check
      _
    $region35: #{tpu_custom_call.1} parent=1 // pred_check_branch
      %419 = sbr.rel (0) target = $region37
    $region36: #{tpu_custom_call.1} parent=1 // pred_region
      %s421 = ssub.s32 256, 256
      %422 = vsyncadd [#allocation4], %s421
      %s423 = sshll.u32 [#allocation8], 4
      %s424 = int_to_ptr.vmem [resolvable:$true] %s423
      %429 = dma.vmem_to_hbm [thread:$0]  %s424, 256, %s5, [#allocation4], 128, 128, 8
    $region37: #{tpu_custom_call.1} parent=1 // pred_fallthru
      _
    // Predicated region
    $region38: #{tpu_custom_call.1} parent=1 // pred_check
      _
    $region39: #{tpu_custom_call.1} parent=1 // pred_check_branch
      %431 = sbr.rel (0) target = $region41
    $region40: #{tpu_custom_call.1} parent=1 // pred_region
      %432 = dma.done [#allocation4], 256
    $region41: #{tpu_custom_call.1} parent=1 // pred_fallthru
      _
    %433 = vsyncpa [#allocation3], 1
    %434 = vsyncpa [#allocation6], 1
    %435 = vsyncpa [#allocation4], 1

</llo_original>
